<compile_context>
chip_gen: v5e
topology: v5e:2x2
jax: 0.10.0
libtpu: 0.0.40
codegen_flags: <defaults>
</compile_context>

<pallas_src>
import functools

import jax
import jax.numpy as jnp
from jax.experimental import pallas as pl
from jax.experimental.pallas import tpu as pltpu

_LANE = 128
_BN_EPS = 1e-5
_NEG_BIG = -1e30  # mask value for padded logit columns before softmax


def _round_up(n, m):
    return ((n + m - 1) // m) * m


def _fused_mlp_kernel(*refs, num_layers: int, use_bn: bool, valid_out: int):
    """Fully fused MLP forward.

    refs layout: x_ref, then per layer (gamma, beta, w_t, b), then out_ref.
      x_ref:     (B, F0p)    input activations (feature dim zero-padded)
      gamma/beta:(1, Finp)   BN affine params
      w_t:       (Finp,Foutp)Linear weight, pre-transposed + zero-padded
      b:         (1, Foutp)  Linear bias, zero-padded
      out_ref:   (B, FLp)    padded softmax output (lane-dense store)
    """
    x_ref = refs[0]
    out_ref = refs[-1]
    layer_refs = refs[1:-1]

    x = x_ref[...].astype(jnp.float32)
    for i in range(num_layers):
        gamma_ref, beta_ref, w_ref, b_ref = layer_refs[4 * i:4 * i + 4]

        if use_bn:
            # BatchNorm1d, training-mode stats: batch mean + biased variance.
            mean = jnp.mean(x, axis=0, keepdims=True)
            centered = x - mean
            var = jnp.mean(centered * centered, axis=0, keepdims=True)
            # Fold gamma into the rsqrt scale: saves one full-tile multiply.
            scale = gamma_ref[...] * jax.lax.rsqrt(var + _BN_EPS)
            x = centered * scale + beta_ref[...]

        # Linear: y = x @ W + b  (MXU matmul, f32 accumulation)
        y = jnp.dot(x, w_ref[...], preferred_element_type=jnp.float32)
        y = y + b_ref[...]

        if i < num_layers - 1:
            x = jnp.maximum(y, 0.0)                      # ReLU
        else:
            # Mask padded logit columns, then numerically stable softmax.
            col = jax.lax.broadcasted_iota(jnp.int32, y.shape, 1)
            y = jnp.where(col < valid_out, y, _NEG_BIG)
            m = jnp.max(y, axis=-1, keepdims=True)
            e = jnp.exp(y - m)
            denom = jnp.sum(e, axis=-1, keepdims=True)
            x = e * pl.reciprocal(denom, approx=True)    # EUP vrcp, ~free

    out_ref[...] = x.astype(out_ref.dtype)


def init_mlp_params(key, input_size, output_size, number_of_layers,
                    hidden_size, hidden_size_adaptation):
    """Deterministic synthetic init mirroring the PyTorch layer shapes.

    Linear: weight (out, in) ~ U(-1/sqrt(in), 1/sqrt(in)) (stored transposed),
            bias   (out,)    ~ same range.
    BatchNorm1d: gamma = 1, beta = 0.
    All parameters are zero-padded so every feature dim is a multiple of 128.
    """
    sizes = [(input_size, hidden_size)]
    h = hidden_size
    for _ in range(number_of_layers - 2):
        new_h = int(h // hidden_size_adaptation)
        sizes.append((h, new_h))
        h = new_h
    sizes.append((h, output_size))  # fc_out

    params = []
    for (fin, fout) in sizes:
        key, kw, kb = jax.random.split(key, 3)
        bound = 1.0 / (float(fin) ** 0.5)
        fin_p = _round_up(fin, _LANE)
        fout_p = _round_up(fout, _LANE)

        w = jax.random.uniform(kw, (fin, fout), jnp.float32, -bound, bound)
        b = jax.random.uniform(kb, (1, fout), jnp.float32, -bound, bound)

        w_t = jnp.zeros((fin_p, fout_p), jnp.float32).at[:fin, :fout].set(w)
        b_p = jnp.zeros((1, fout_p), jnp.float32).at[:, :fout].set(b)
        gamma = jnp.ones((1, fin_p), jnp.float32)
        beta = jnp.zeros((1, fin_p), jnp.float32)
        params.append(dict(gamma=gamma, beta=beta, w_t=w_t, b=b_p))
    return params


def tabulartrain_forward(x, params, *, output_size, batch_norm=True):
    """Forward pass of Tabulartrain.model (the MLP) as ONE fused Pallas call."""
    B, fin = x.shape
    fin_p = params[0]["w_t"].shape[0]
    fout_p = params[-1]["w_t"].shape[1]
    num_layers = len(params)

    # Zero-pad the input feature dim to match the padded first-layer weight.
    x_p = jnp.zeros((B, fin_p), jnp.float32).at[:, :fin].set(
        x.astype(jnp.float32))

    flat_inputs = [x_p]
    for p in params:
        flat_inputs += [p["gamma"], p["beta"], p["w_t"], p["b"]]

    kernel = functools.partial(_fused_mlp_kernel, num_layers=num_layers,
                               use_bn=batch_norm, valid_out=output_size)

    full = lambda a: pl.BlockSpec(a.shape, lambda: tuple(0 for _ in a.shape))
    out_p = pl.pallas_call(
        kernel,
        out_shape=jax.ShapeDtypeStruct((B, fout_p), jnp.float32),
        in_specs=[full(a) for a in flat_inputs],
        out_specs=pl.BlockSpec((B, fout_p), lambda: (0, 0)),
        compiler_params=pltpu.CompilerParams(
            vmem_limit_bytes=16 * 1024 * 1024),
    )(*flat_inputs)

    # Slice away padded output columns (softmax already masked them to ~0).
    return out_p[:, :output_size]


if __name__ == "__main__":
    # Small config consistent with the module's constructor.
    input_size = 10
    output_size = 3
    config = dict(number_of_layers=3, hidden_size=32,
                  hidden_size_adaptation=2.0, batch_normalization=True)
    batch = 8

    key = jax.random.PRNGKey(0)
    key, kx = jax.random.split(key)
    x = jax.random.normal(kx, (batch, input_size), jnp.float32)

    params = init_mlp_params(key, input_size, output_size,
                             config["number_of_layers"],
                             config["hidden_size"],
                             config["hidden_size_adaptation"])

    out = tabulartrain_forward(x, params, output_size=output_size,
                               batch_norm=config["batch_normalization"])
    out = jax.block_until_ready(out)

    assert out.shape == (batch, output_size)
    assert bool(jnp.all(jnp.isfinite(out)))
    # softmax rows sum to ~1 (approx reciprocal tolerance)
    assert jnp.allclose(jnp.sum(out, axis=-1), 1.0, atol=1e-2)
    print("KERNEL_OK")
</pallas_src>

<mosaic_0001>
module attributes {stable_mosaic.version = 11 : i64} {
  func.func @_fused_mlp_kernel(%arg0: memref<8x128xf32, #tpu.memory_space<vmem>>, %arg1: memref<1x128xf32, #tpu.memory_space<vmem>>, %arg2: memref<1x128xf32, #tpu.memory_space<vmem>>, %arg3: memref<128x128xf32, #tpu.memory_space<vmem>>, %arg4: memref<1x128xf32, #tpu.memory_space<vmem>>, %arg5: memref<1x128xf32, #tpu.memory_space<vmem>>, %arg6: memref<1x128xf32, #tpu.memory_space<vmem>>, %arg7: memref<128x128xf32, #tpu.memory_space<vmem>>, %arg8: memref<1x128xf32, #tpu.memory_space<vmem>>, %arg9: memref<1x128xf32, #tpu.memory_space<vmem>>, %arg10: memref<1x128xf32, #tpu.memory_space<vmem>>, %arg11: memref<128x128xf32, #tpu.memory_space<vmem>>, %arg12: memref<1x128xf32, #tpu.memory_space<vmem>>, %arg13: memref<8x128xf32, #tpu.memory_space<vmem>>) attributes {dimension_semantics = [], scalar_prefetch = 0 : i64, scratch_operands = 0 : i64, tpu.core_type = #tpu.core_type<tc>} {
    %c0 = arith.constant 0 : index
    %c0_0 = arith.constant 0 : index
    %0 = vector.load %arg0[%c0, %c0_0] : memref<8x128xf32, #tpu.memory_space<vmem>>, vector<8x128xf32>
    %cst = arith.constant dense<0.000000e+00> : vector<128xf32>
    %1 = vector.multi_reduction <add>, %0, %cst [0] : vector<8x128xf32> to vector<128xf32>
    %2 = vector.shape_cast %1 : vector<128xf32> to vector<1x128xf32>
    %cst_1 = arith.constant 8.000000e+00 : f32
    %3 = vector.broadcast %cst_1 : f32 to vector<1x128xf32>
    %4 = arith.divf %2, %3 : vector<1x128xf32>
    %5 = vector.broadcast %4 : vector<1x128xf32> to vector<8x128xf32>
    %6 = arith.subf %0, %5 : vector<8x128xf32>
    %7 = arith.mulf %6, %6 : vector<8x128xf32>
    %cst_2 = arith.constant dense<0.000000e+00> : vector<128xf32>
    %8 = vector.multi_reduction <add>, %7, %cst_2 [0] : vector<8x128xf32> to vector<128xf32>
    %9 = vector.shape_cast %8 : vector<128xf32> to vector<1x128xf32>
    %cst_3 = arith.constant 8.000000e+00 : f32
    %10 = vector.broadcast %cst_3 : f32 to vector<1x128xf32>
    %11 = arith.divf %9, %10 : vector<1x128xf32>
    %c0_4 = arith.constant 0 : index
    %c0_5 = arith.constant 0 : index
    %12 = vector.load %arg1[%c0_4, %c0_5] : memref<1x128xf32, #tpu.memory_space<vmem>>, vector<1x128xf32>
    %cst_6 = arith.constant 9.99999974E-6 : f32
    %13 = vector.broadcast %cst_6 : f32 to vector<1x128xf32>
    %14 = arith.addf %11, %13 : vector<1x128xf32>
    %15 = math.rsqrt %14 : vector<1x128xf32>
    %16 = arith.mulf %12, %15 : vector<1x128xf32>
    %17 = vector.broadcast %16 : vector<1x128xf32> to vector<8x128xf32>
    %18 = arith.mulf %6, %17 : vector<8x128xf32>
    %c0_7 = arith.constant 0 : index
    %c0_8 = arith.constant 0 : index
    %19 = vector.load %arg2[%c0_7, %c0_8] : memref<1x128xf32, #tpu.memory_space<vmem>>, vector<1x128xf32>
    %20 = vector.broadcast %19 : vector<1x128xf32> to vector<8x128xf32>
    %21 = arith.addf %18, %20 : vector<8x128xf32>
    %c0_9 = arith.constant 0 : index
    %c0_10 = arith.constant 0 : index
    %22 = vector.load %arg3[%c0_9, %c0_10] : memref<128x128xf32, #tpu.memory_space<vmem>>, vector<128x128xf32>
    %cst_11 = arith.constant dense<0.000000e+00> : vector<8x128xf32>
    %23 = tpu.matmul %21, %22, %cst_11 {dimension_numbers = #tpu.dot_dimension_numbers<[1], [0], [0], [1], [0, 0, 1, 1], [], []>} : vector<8x128xf32>, vector<128x128xf32>, vector<8x128xf32> -> vector<8x128xf32>
    %c0_12 = arith.constant 0 : index
    %c0_13 = arith.constant 0 : index
    %24 = vector.load %arg4[%c0_12, %c0_13] : memref<1x128xf32, #tpu.memory_space<vmem>>, vector<1x128xf32>
    %25 = vector.broadcast %24 : vector<1x128xf32> to vector<8x128xf32>
    %26 = arith.addf %23, %25 : vector<8x128xf32>
    %cst_14 = arith.constant 0.000000e+00 : f32
    %27 = vector.broadcast %cst_14 : f32 to vector<8x128xf32>
    %28 = arith.maximumf %26, %27 : vector<8x128xf32>
    %cst_15 = arith.constant dense<0.000000e+00> : vector<128xf32>
    %29 = vector.multi_reduction <add>, %28, %cst_15 [0] : vector<8x128xf32> to vector<128xf32>
    %30 = vector.shape_cast %29 : vector<128xf32> to vector<1x128xf32>
    %cst_16 = arith.constant 8.000000e+00 : f32
    %31 = vector.broadcast %cst_16 : f32 to vector<1x128xf32>
    %32 = arith.divf %30, %31 : vector<1x128xf32>
    %33 = vector.broadcast %32 : vector<1x128xf32> to vector<8x128xf32>
    %34 = arith.subf %28, %33 : vector<8x128xf32>
    %35 = arith.mulf %34, %34 : vector<8x128xf32>
    %cst_17 = arith.constant dense<0.000000e+00> : vector<128xf32>
    %36 = vector.multi_reduction <add>, %35, %cst_17 [0] : vector<8x128xf32> to vector<128xf32>
    %37 = vector.shape_cast %36 : vector<128xf32> to vector<1x128xf32>
    %cst_18 = arith.constant 8.000000e+00 : f32
    %38 = vector.broadcast %cst_18 : f32 to vector<1x128xf32>
    %39 = arith.divf %37, %38 : vector<1x128xf32>
    %c0_19 = arith.constant 0 : index
    %c0_20 = arith.constant 0 : index
    %40 = vector.load %arg5[%c0_19, %c0_20] : memref<1x128xf32, #tpu.memory_space<vmem>>, vector<1x128xf32>
    %cst_21 = arith.constant 9.99999974E-6 : f32
    %41 = vector.broadcast %cst_21 : f32 to vector<1x128xf32>
    %42 = arith.addf %39, %41 : vector<1x128xf32>
    %43 = math.rsqrt %42 : vector<1x128xf32>
    %44 = arith.mulf %40, %43 : vector<1x128xf32>
    %45 = vector.broadcast %44 : vector<1x128xf32> to vector<8x128xf32>
    %46 = arith.mulf %34, %45 : vector<8x128xf32>
    %c0_22 = arith.constant 0 : index
    %c0_23 = arith.constant 0 : index
    %47 = vector.load %arg6[%c0_22, %c0_23] : memref<1x128xf32, #tpu.memory_space<vmem>>, vector<1x128xf32>
    %48 = vector.broadcast %47 : vector<1x128xf32> to vector<8x128xf32>
    %49 = arith.addf %46, %48 : vector<8x128xf32>
    %c0_24 = arith.constant 0 : index
    %c0_25 = arith.constant 0 : index
    %50 = vector.load %arg7[%c0_24, %c0_25] : memref<128x128xf32, #tpu.memory_space<vmem>>, vector<128x128xf32>
    %cst_26 = arith.constant dense<0.000000e+00> : vector<8x128xf32>
    %51 = tpu.matmul %49, %50, %cst_26 {dimension_numbers = #tpu.dot_dimension_numbers<[1], [0], [0], [1], [0, 0, 1, 1], [], []>} : vector<8x128xf32>, vector<128x128xf32>, vector<8x128xf32> -> vector<8x128xf32>
    %c0_27 = arith.constant 0 : index
    %c0_28 = arith.constant 0 : index
    %52 = vector.load %arg8[%c0_27, %c0_28] : memref<1x128xf32, #tpu.memory_space<vmem>>, vector<1x128xf32>
    %53 = vector.broadcast %52 : vector<1x128xf32> to vector<8x128xf32>
    %54 = arith.addf %51, %53 : vector<8x128xf32>
    %cst_29 = arith.constant 0.000000e+00 : f32
    %55 = vector.broadcast %cst_29 : f32 to vector<8x128xf32>
    %56 = arith.maximumf %54, %55 : vector<8x128xf32>
    %cst_30 = arith.constant dense<0.000000e+00> : vector<128xf32>
    %57 = vector.multi_reduction <add>, %56, %cst_30 [0] : vector<8x128xf32> to vector<128xf32>
    %58 = vector.shape_cast %57 : vector<128xf32> to vector<1x128xf32>
    %cst_31 = arith.constant 8.000000e+00 : f32
    %59 = vector.broadcast %cst_31 : f32 to vector<1x128xf32>
    %60 = arith.divf %58, %59 : vector<1x128xf32>
    %61 = vector.broadcast %60 : vector<1x128xf32> to vector<8x128xf32>
    %62 = arith.subf %56, %61 : vector<8x128xf32>
    %63 = arith.mulf %62, %62 : vector<8x128xf32>
    %cst_32 = arith.constant dense<0.000000e+00> : vector<128xf32>
    %64 = vector.multi_reduction <add>, %63, %cst_32 [0] : vector<8x128xf32> to vector<128xf32>
    %65 = vector.shape_cast %64 : vector<128xf32> to vector<1x128xf32>
    %cst_33 = arith.constant 8.000000e+00 : f32
    %66 = vector.broadcast %cst_33 : f32 to vector<1x128xf32>
    %67 = arith.divf %65, %66 : vector<1x128xf32>
    %c0_34 = arith.constant 0 : index
    %c0_35 = arith.constant 0 : index
    %68 = vector.load %arg9[%c0_34, %c0_35] : memref<1x128xf32, #tpu.memory_space<vmem>>, vector<1x128xf32>
    %cst_36 = arith.constant 9.99999974E-6 : f32
    %69 = vector.broadcast %cst_36 : f32 to vector<1x128xf32>
    %70 = arith.addf %67, %69 : vector<1x128xf32>
    %71 = math.rsqrt %70 : vector<1x128xf32>
    %72 = arith.mulf %68, %71 : vector<1x128xf32>
    %73 = vector.broadcast %72 : vector<1x128xf32> to vector<8x128xf32>
    %74 = arith.mulf %62, %73 : vector<8x128xf32>
    %c0_37 = arith.constant 0 : index
    %c0_38 = arith.constant 0 : index
    %75 = vector.load %arg10[%c0_37, %c0_38] : memref<1x128xf32, #tpu.memory_space<vmem>>, vector<1x128xf32>
    %76 = vector.broadcast %75 : vector<1x128xf32> to vector<8x128xf32>
    %77 = arith.addf %74, %76 : vector<8x128xf32>
    %c0_39 = arith.constant 0 : index
    %c0_40 = arith.constant 0 : index
    %78 = vector.load %arg11[%c0_39, %c0_40] : memref<128x128xf32, #tpu.memory_space<vmem>>, vector<128x128xf32>
    %cst_41 = arith.constant dense<0.000000e+00> : vector<8x128xf32>
    %79 = tpu.matmul %77, %78, %cst_41 {dimension_numbers = #tpu.dot_dimension_numbers<[1], [0], [0], [1], [0, 0, 1, 1], [], []>} : vector<8x128xf32>, vector<128x128xf32>, vector<8x128xf32> -> vector<8x128xf32>
    %c0_42 = arith.constant 0 : index
    %c0_43 = arith.constant 0 : index
    %80 = vector.load %arg12[%c0_42, %c0_43] : memref<1x128xf32, #tpu.memory_space<vmem>>, vector<1x128xf32>
    %81 = vector.broadcast %80 : vector<1x128xf32> to vector<8x128xf32>
    %82 = arith.addf %79, %81 : vector<8x128xf32>
    %83 = tpu.iota {dimensions = array<i32: 1>} : vector<8x128xi32>
    %c3_i32 = arith.constant 3 : i32
    %84 = vector.broadcast %c3_i32 : i32 to vector<8x128xi32>
    %85 = arith.cmpi slt, %83, %84 : vector<8x128xi32>
    %cst_44 = arith.constant -1.000000e+30 : f32
    %86 = vector.broadcast %cst_44 : f32 to vector<8x128xf32>
    %87 = arith.select %85, %82, %86 : vector<8x128xi1>, vector<8x128xf32>
    %cst_45 = arith.constant dense<0xFF800000> : vector<8xf32>
    %88 = vector.multi_reduction <maximumf>, %87, %cst_45 [1] : vector<8x128xf32> to vector<8xf32>
    %89 = vector.shape_cast %88 : vector<8xf32> to vector<8x1xf32>
    %90 = vector.broadcast %89 : vector<8x1xf32> to vector<8x128xf32>
    %91 = arith.subf %87, %90 : vector<8x128xf32>
    %92 = math.exp %91 : vector<8x128xf32>
    %cst_46 = arith.constant dense<0.000000e+00> : vector<8xf32>
    %93 = vector.multi_reduction <add>, %92, %cst_46 [1] : vector<8x128xf32> to vector<8xf32>
    %94 = vector.shape_cast %93 : vector<8xf32> to vector<8x1xf32>
    %95 = tpu.reciprocal %94 {approx = true} : vector<8x1xf32> -> vector<8x1xf32>
    %96 = vector.broadcast %95 : vector<8x1xf32> to vector<8x128xf32>
    %97 = arith.mulf %92, %96 : vector<8x128xf32>
    %c0_47 = arith.constant 0 : index
    %c0_48 = arith.constant 0 : index
    %98 = vector.load %arg13[%c0_47, %c0_48] : memref<8x128xf32, #tpu.memory_space<vmem>>, vector<8x128xf32>
    tpu.vector_store %arg13[%c0_47, %c0_48], %97 {strides = array<i32>} : memref<8x128xf32, #tpu.memory_space<vmem>>, vector<8x128xf32>,
    return
  }
}

</mosaic_0001>

<llo_original>
// kernel: tpu_custom_call.1
$region0: #{tpu_custom_call.1}
  #allocation0 [shape = 'u32[]', space=smem, size = 0x4, offset = 0x4, fixed_abs, tag = 'smem constant byte address 0x4 - core index']
  #allocation1 [shape = 'u32[72,128]{1,0:T(1,128)}', space=vmem, size = 0x9000, scoped, tag = 'internal scratch']
  %s0 = inlined_call_operand.hbm [shape: f32[8,128], index: 0, kind: input, shape index: {}]
  %s1 = inlined_call_operand.hbm [shape: f32[1,128], index: 1, kind: input, shape index: {}]
  %s2 = inlined_call_operand.vmem [shape: f32[1,128], index: 2, kind: input, shape index: {}]
  %s3 = inlined_call_operand.hbm [shape: f32[128,128], index: 3, kind: input, shape index: {}]
  %s4 = inlined_call_operand.vmem [shape: f32[1,128], index: 4, kind: input, shape index: {}]
  %s5 = inlined_call_operand.vmem [shape: f32[1,128], index: 5, kind: input, shape index: {}]
  %s6 = inlined_call_operand.vmem [shape: f32[1,128], index: 6, kind: input, shape index: {}]
  %s7 = inlined_call_operand.hbm [shape: f32[128,128], index: 7, kind: input, shape index: {}]
  %s8 = inlined_call_operand.vmem [shape: f32[1,128], index: 8, kind: input, shape index: {}]
  %s9 = inlined_call_operand.vmem [shape: f32[1,128], index: 9, kind: input, shape index: {}]
  %s10 = inlined_call_operand.vmem [shape: f32[1,128], index: 10, kind: input, shape index: {}]
  %s11 = inlined_call_operand.hbm [shape: f32[128,128], index: 11, kind: input, shape index: {}]
  %s12 = inlined_call_operand.vmem [shape: f32[1,128], index: 12, kind: input, shape index: {}]
  %s13 = inlined_call_operand.hbm [shape: f32[8,128], index: 13, kind: output, shape index: {}]
  %s14 = sld [smem:[#allocation0]]
  $region82: #{tpu_custom_call.1} parent=0
    _
  %s16 = ssub.s32 1, %s14
  %s17 = scalar_select 0, %s16, %s14
  $region1: #{tpu_custom_call.1} parent=0
    #allocation2 [shape = 'u8[4096]{0}', space=vmem, size = 0x1000, scoped, tag = 'input window, operand 0, single buffered']
    #allocation3 [shape = 's32[1]{0}', space=sflag, size = 0x4, scoped, tag = 'scoped memory for tpu_custom_call.1']
    #allocation4 [shape = 's32[1]{0}', space=sflag, size = 0x4, scoped, tag = 'scoped memory for tpu_custom_call.1']
    #allocation5 [shape = 'u8[512]{0}', space=vmem, size = 0x400, scoped, tag = 'input window, operand 1, single buffered']
    #allocation6 [shape = 's32[1]{0}', space=sflag, size = 0x4, scoped, tag = 'scoped memory for tpu_custom_call.1']
    #allocation7 [shape = 'u8[65536]{0}', space=vmem, size = 0x10000, scoped, tag = 'input window, operand 3, single buffered']
    #allocation8 [shape = 'u8[65536]{0}', space=vmem, size = 0x10000, scoped, tag = 'input window, operand 7, single buffered']
    #allocation9 [shape = 's32[1]{0}', space=sflag, size = 0x4, scoped, tag = 'scoped memory for tpu_custom_call.1']
    #allocation10 [shape = 'u8[65536]{0}', space=vmem, size = 0x10000, scoped, tag = 'input window, operand 11, single buffered']
    #allocation11 [shape = 'u8[4096]{0}', space=vmem, size = 0x1000, scoped, tag = 'output window, operand 0, single buffered']
    %18 = vsyncpa [#allocation3], 0
    %19 = vsyncpa [#allocation6], 0
    %20 = vsyncpa [#allocation9], 0
    %21 = vsyncpa [#allocation4], 0
    // Predicated region
    $region2: #{tpu_custom_call.1} parent=1 // pred_check
      _
    $region3: #{tpu_custom_call.1} parent=1 // pred_check_branch
      %23 = sbr.rel (0) target = $region5
    $region4: #{tpu_custom_call.1} parent=1 // pred_region
      %25 = vsyncadd [#allocation3], 0
      %s27 = sshll.u32 %s0, 4
      %s28 = int_to_ptr.hbm [resolvable:$true] %s27
      %s29 = sshll.u32 [#allocation2], 4
      %s30 = int_to_ptr.vmem [resolvable:$true] %s29
      %32 = dma.hbm_to_vmem [thread:$0]  %s28, 128, %s30, [#allocation3]
    $region5: #{tpu_custom_call.1} parent=1 // pred_fallthru
      _
    // Predicated region
    $region6: #{tpu_custom_call.1} parent=1 // pred_check
      _
    $region7: #{tpu_custom_call.1} parent=1 // pred_check_branch
      %34 = sbr.rel (0) target = $region9
    $region8: #{tpu_custom_call.1} parent=1 // pred_region
      %36 = vsyncadd [#allocation6], 0
      %s38 = sshll.u32 %s1, 4
      %s39 = int_to_ptr.hbm [resolvable:$true] %s38
      %s40 = sshll.u32 [#allocation5], 4
      %s41 = int_to_ptr.vmem [resolvable:$true] %s40
      %43 = dma.hbm_to_vmem [thread:$0]  %s39, 16, %s41, [#allocation6]
    $region9: #{tpu_custom_call.1} parent=1 // pred_fallthru
      _
    // Predicated region
    $region10: #{tpu_custom_call.1} parent=1 // pred_check
      _
    $region11: #{tpu_custom_call.1} parent=1 // pred_check_branch
      %45 = sbr.rel (0) target = $region13
    $region12: #{tpu_custom_call.1} parent=1 // pred_region
      _
    $region13: #{tpu_custom_call.1} parent=1 // pred_fallthru
      _
    // Predicated region
    $region14: #{tpu_custom_call.1} parent=1 // pred_check
      _
    $region15: #{tpu_custom_call.1} parent=1 // pred_check_branch
      %47 = sbr.rel (0) target = $region17
    $region16: #{tpu_custom_call.1} parent=1 // pred_region
      %49 = vsyncadd [#allocation6], 0
      %s50 = sshll.u32 %s3, 4
      %s51 = int_to_ptr.hbm [resolvable:$true] %s50
      %s52 = sshll.u32 [#allocation7], 4
      %s53 = int_to_ptr.vmem [resolvable:$true] %s52
      %58 = dma.hbm_to_vmem [thread:$0]  %s51, 2048, %s53, [#allocation6], 128, 128, 8
    $region17: #{tpu_custom_call.1} parent=1 // pred_fallthru
      _
    // Predicated region
    $region18: #{tpu_custom_call.1} parent=1 // pred_check
      _
    $region19: #{tpu_custom_call.1} parent=1 // pred_check_branch
      %60 = sbr.rel (0) target = $region21
    $region20: #{tpu_custom_call.1} parent=1 // pred_region
      _
    $region21: #{tpu_custom_call.1} parent=1 // pred_fallthru
      _
    // Predicated region
    $region22: #{tpu_custom_call.1} parent=1 // pred_check
      _
    $region23: #{tpu_custom_call.1} parent=1 // pred_check_branch
      %62 = sbr.rel (0) target = $region25
    $region24: #{tpu_custom_call.1} parent=1 // pred_region
      _
    $region25: #{tpu_custom_call.1} parent=1 // pred_fallthru
      _
    // Predicated region
    $region26: #{tpu_custom_call.1} parent=1 // pred_check
      _
    $region27: #{tpu_custom_call.1} parent=1 // pred_check_branch
      %64 = sbr.rel (0) target = $region29
    $region28: #{tpu_custom_call.1} parent=1 // pred_region
      _
    $region29: #{tpu_custom_call.1} parent=1 // pred_fallthru
      _
    // Predicated region
    $region30: #{tpu_custom_call.1} parent=1 // pred_check
      _
    $region31: #{tpu_custom_call.1} parent=1 // pred_check_branch
      %66 = sbr.rel (0) target = $region33
    $region32: #{tpu_custom_call.1} parent=1 // pred_region
      %68 = vsyncadd [#allocation9], 0
      %s69 = sshll.u32 %s7, 4
      %s70 = int_to_ptr.hbm [resolvable:$true] %s69
      %s71 = sshll.u32 [#allocation8], 4
      %s72 = int_to_ptr.vmem [resolvable:$true] %s71
      %77 = dma.hbm_to_vmem [thread:$0]  %s70, 2048, %s72, [#allocation9], 128, 128, 8
    $region33: #{tpu_custom_call.1} parent=1 // pred_fallthru
      _
    // Predicated region
    $region34: #{tpu_custom_call.1} parent=1 // pred_check
      _
    $region35: #{tpu_custom_call.1} parent=1 // pred_check_branch
      %79 = sbr.rel (0) target = $region37
    $region36: #{tpu_custom_call.1} parent=1 // pred_region
      _
    $region37: #{tpu_custom_call.1} parent=1 // pred_fallthru
      _
    // Predicated region
    $region38: #{tpu_custom_call.1} parent=1 // pred_check
      _
    $region39: #{tpu_custom_call.1} parent=1 // pred_check_branch
      %81 = sbr.rel (0) target = $region41
    $region40: #{tpu_custom_call.1} parent=1 // pred_region
      _
    $region41: #{tpu_custom_call.1} parent=1 // pred_fallthru
      _
    // Predicated region
    $region42: #{tpu_custom_call.1} parent=1 // pred_check
      _
    $region43: #{tpu_custom_call.1} parent=1 // pred_check_branch
      %83 = sbr.rel (0) target = $region45
    $region44: #{tpu_custom_call.1} parent=1 // pred_region
      _
    $region45: #{tpu_custom_call.1} parent=1 // pred_fallthru
      _
    // Predicated region
    $region46: #{tpu_custom_call.1} parent=1 // pred_check
      _
    $region47: #{tpu_custom_call.1} parent=1 // pred_check_branch
      %85 = sbr.rel (0) target = $region49
    $region48: #{tpu_custom_call.1} parent=1 // pred_region
      %87 = vsyncadd [#allocation9], 0
      %s88 = sshll.u32 %s11, 4
      %s89 = int_to_ptr.hbm [resolvable:$true] %s88
      %s90 = sshll.u32 [#allocation10], 4
      %s91 = int_to_ptr.vmem [resolvable:$true] %s90
      %96 = dma.hbm_to_vmem [thread:$0]  %s89, 2048, %s91, [#allocation9], 128, 128, 8
    $region49: #{tpu_custom_call.1} parent=1 // pred_fallthru
      _
    // Predicated region
    $region50: #{tpu_custom_call.1} parent=1 // pred_check
      _
    $region51: #{tpu_custom_call.1} parent=1 // pred_check_branch
      %98 = sbr.rel (0) target = $region53
    $region52: #{tpu_custom_call.1} parent=1 // pred_region
      _
    $region53: #{tpu_custom_call.1} parent=1 // pred_fallthru
      _
    // Predicated region
    $region54: #{tpu_custom_call.1} parent=1 // pred_check
      _
    $region55: #{tpu_custom_call.1} parent=1 // pred_check_branch
      %100 = sbr.rel (0) target = $region57
    $region56: #{tpu_custom_call.1} parent=1 // pred_region
      %102 = dma.done [#allocation3], 128
    $region57: #{tpu_custom_call.1} parent=1 // pred_fallthru
      _
    // Predicated region
    $region58: #{tpu_custom_call.1} parent=1 // pred_check
      _
    $region59: #{tpu_custom_call.1} parent=1 // pred_check_branch
      %104 = sbr.rel (0) target = $region61
    $region60: #{tpu_custom_call.1} parent=1 // pred_region
      %106 = dma.done [#allocation6], 16
    $region61: #{tpu_custom_call.1} parent=1 // pred_fallthru
      _
    // Predicated region
    $region62: #{tpu_custom_call.1} parent=1 // pred_check
      _
    $region63: #{tpu_custom_call.1} parent=1 // pred_check_branch
      %108 = sbr.rel (0) target = $region65
    $region64: #{tpu_custom_call.1} parent=1 // pred_region
      %110 = dma.done [#allocation6], 2048
    $region65: #{tpu_custom_call.1} parent=1 // pred_fallthru
      _
    // Predicated region
    $region66: #{tpu_custom_call.1} parent=1 // pred_check
      _
    $region67: #{tpu_custom_call.1} parent=1 // pred_check_branch
      %112 = sbr.rel (0) target = $region69
    $region68: #{tpu_custom_call.1} parent=1 // pred_region
      %114 = dma.done [#allocation9], 2048
    $region69: #{tpu_custom_call.1} parent=1 // pred_fallthru
      _
    // Predicated region
    $region70: #{tpu_custom_call.1} parent=1 // pred_check
      _
    $region71: #{tpu_custom_call.1} parent=1 // pred_check_branch
      %116 = sbr.rel (0) target = $region73
    $region72: #{tpu_custom_call.1} parent=1 // pred_region
      %118 = dma.done [#allocation9], 2048
    $region73: #{tpu_custom_call.1} parent=1 // pred_fallthru
      _
    %v119 = vld [vmem:[#allocation2] sm:$0xff]
    %v120 = vrot.slane %v119, 4
    %v121 = vadd.f32 %v119, %v120
    %v122 = vrot.slane %v121, 2
    %v123 = vadd.f32 %v121, %v122
    %v124 = vrot.slane %v123, 1
    %v125 = vadd.f32 %v123, %v124
    %v126 = vrcp.pop 8.0
    %v127 = vmul.f32 8.0, %v126
    %v128 = vsub.f32 1.0, %v127
    %v129 = vmul.f32 %v126, %v128
    %v130 = vadd.f32 %v126, %v129
    %vm131 = vweird.f32 %v126
    %v132 = vsel %vm131, %v126, %v130
    %v133 = vmul.f32 %v125, %v132
    %v134 = vsub.f32 %v119, %v133
    %v135 = vmul.f32 %v134, %v134
    %v136 = vrot.slane %v135, 4
    %v137 = vadd.f32 %v135, %v136
    %v138 = vrot.slane %v137, 2
    %v139 = vadd.f32 %v137, %v138
    %v140 = vrot.slane %v139, 1
    %v141 = vadd.f32 %v139, %v140
    %v142 = vmul.f32 %v141, %v132
    %v143 = vld [vmem:[#allocation5] sm:$0x1]
    %v144 = vadd.f32 %v142, 1e-05
    %v145 = vrsqrt.pop %v144
    %v146 = vmul.f32 %v145, %v144
    %v147 = vmul.f32 %v146, %v145
    %v148 = vmul.f32 0.5, %v147
    %v149 = vsub.f32 1.5, %v148
    %v150 = vmul.f32 %v145, %v149
    %vm151 = vweird.f32 %v144
    %vm152 = vweird.f32 %v145
    %vm153 = vmor %vm151, %vm152
    %v154 = vsel %vm153, %v145, %v150
    %v155 = vmul.f32 %v143, %v154
    %v157 = vperm.slane %v155, 0
    %v159 = vmul.f32 %v134, %v157
    %v160 = vld [vmem:[%s2] sm:$0x1]
    %v162 = vperm.slane %v160, 0
    %v164 = vadd.f32 %v159, %v162
    %v165 = vld [vmem:[#allocation7] sm:$0xff]
    %v166 = vld [vmem:[#allocation7 + $0x8] sm:$0xff]
    %v167 = vld [vmem:[#allocation7 + $0x10] sm:$0xff]
    %v168 = vld [vmem:[#allocation7 + $0x18] sm:$0xff]
    %v169 = vld [vmem:[#allocation7 + $0x20] sm:$0xff]
    %v170 = vld [vmem:[#allocation7 + $0x28] sm:$0xff]
    %v171 = vld [vmem:[#allocation7 + $0x30] sm:$0xff]
    %v172 = vld [vmem:[#allocation7 + $0x38] sm:$0xff]
    %v173 = vld [vmem:[#allocation7 + $0x40] sm:$0xff]
    %v174 = vld [vmem:[#allocation7 + $0x48] sm:$0xff]
    %v175 = vld [vmem:[#allocation7 + $0x50] sm:$0xff]
    %v176 = vld [vmem:[#allocation7 + $0x58] sm:$0xff]
    %v177 = vld [vmem:[#allocation7 + $0x60] sm:$0xff]
    %v178 = vld [vmem:[#allocation7 + $0x68] sm:$0xff]
    %v179 = vld [vmem:[#allocation7 + $0x70] sm:$0xff]
    %v180 = vld [vmem:[#allocation7 + $0x78] sm:$0xff]
    %v181 = vld [vmem:[%s4] sm:$0x1]
    %v183 = vperm.slane %v181, 0
    %185 = vmatpush.msra.mxu0 %v180
    %186 = vmatpush.msra.mxu0 %v179
    %187 = vmatpush.msra.mxu0 %v178
    %188 = vmatpush.msra.mxu0 %v177
    %189 = vmatpush.msra.mxu0 %v176
    %190 = vmatpush.msra.mxu0 %v175
    %191 = vmatpush.msra.mxu0 %v174
    %192 = vmatpush.msra.mxu0 %v173
    %193 = vmatpush.msra.mxu0 %v172
    %194 = vmatpush.msra.mxu0 %v171
    %195 = vmatpush.msra.mxu0 %v170
    %196 = vmatpush.msra.mxu0 %v169
    %197 = vmatpush.msra.mxu0 %v168
    %198 = vmatpush.msra.mxu0 %v167
    %199 = vmatpush.msra.mxu0 %v166
    %200 = vmatpush.msra.mxu0 %v165
    %201 = vmatmul.f32.gmra.mxu0 %v164
    %v202 = vpop.f32.mrf.mxu0
    %v203 = vadd.f32 %v183, %v202
    %204 = vdwg.mxu0
    %v205 = vmax.f32 %v203, 0.0
    %v206 = vrot.slane %v205, 4
    %v207 = vadd.f32 %v205, %v206
    %v208 = vrot.slane %v207, 2
    %v209 = vadd.f32 %v207, %v208
    %v210 = vrot.slane %v209, 1
    %v211 = vadd.f32 %v209, %v210
    %v212 = vmul.f32 %v211, %v132
    %v213 = vsub.f32 %v205, %v212
    %v214 = vmul.f32 %v213, %v213
    %v215 = vrot.slane %v214, 4
    %v216 = vadd.f32 %v214, %v215
    %v217 = vrot.slane %v216, 2
    %v218 = vadd.f32 %v216, %v217
    %v219 = vrot.slane %v218, 1
    %v220 = vadd.f32 %v218, %v219
    %v221 = vmul.f32 %v220, %v132
    %v222 = vld [vmem:[%s5] sm:$0x1]
    %v223 = vadd.f32 %v221, 1e-05
    %v224 = vrsqrt.pop %v223
    %v225 = vmul.f32 %v224, %v223
    %v226 = vmul.f32 %v225, %v224
    %v227 = vmul.f32 0.5, %v226
    %v228 = vsub.f32 1.5, %v227
    %v229 = vmul.f32 %v224, %v228
    %vm230 = vweird.f32 %v223
    %vm231 = vweird.f32 %v224
    %vm232 = vmor %vm230, %vm231
    %v233 = vsel %vm232, %v224, %v229
    %v234 = vmul.f32 %v222, %v233
    %v236 = vperm.slane %v234, 0
    %v238 = vmul.f32 %v213, %v236
    %v239 = vld [vmem:[%s6] sm:$0x1]
    %v241 = vperm.slane %v239, 0
    %v243 = vadd.f32 %v238, %v241
    %v244 = vld [vmem:[#allocation8] sm:$0xff]
    %v245 = vld [vmem:[#allocation8 + $0x8] sm:$0xff]
    %v246 = vld [vmem:[#allocation8 + $0x10] sm:$0xff]
    %v247 = vld [vmem:[#allocation8 + $0x18] sm:$0xff]
    %v248 = vld [vmem:[#allocation8 + $0x20] sm:$0xff]
    %v249 = vld [vmem:[#allocation8 + $0x28] sm:$0xff]
    %v250 = vld [vmem:[#allocation8 + $0x30] sm:$0xff]
    %v251 = vld [vmem:[#allocation8 + $0x38] sm:$0xff]
    %v252 = vld [vmem:[#allocation8 + $0x40] sm:$0xff]
    %v253 = vld [vmem:[#allocation8 + $0x48] sm:$0xff]
    %v254 = vld [vmem:[#allocation8 + $0x50] sm:$0xff]
    %v255 = vld [vmem:[#allocation8 + $0x58] sm:$0xff]
    %v256 = vld [vmem:[#allocation8 + $0x60] sm:$0xff]
    %v257 = vld [vmem:[#allocation8 + $0x68] sm:$0xff]
    %v258 = vld [vmem:[#allocation8 + $0x70] sm:$0xff]
    %v259 = vld [vmem:[#allocation8 + $0x78] sm:$0xff]
    %v260 = vld [vmem:[%s8] sm:$0x1]
    %v262 = vperm.slane %v260, 0
    %264 = vmatpush.msra.mxu0 %v259
    %265 = vmatpush.msra.mxu0 %v258
    %266 = vmatpush.msra.mxu0 %v257
    %267 = vmatpush.msra.mxu0 %v256
    %268 = vmatpush.msra.mxu0 %v255
    %269 = vmatpush.msra.mxu0 %v254
    %270 = vmatpush.msra.mxu0 %v253
    %271 = vmatpush.msra.mxu0 %v252
    %272 = vmatpush.msra.mxu0 %v251
    %273 = vmatpush.msra.mxu0 %v250
    %274 = vmatpush.msra.mxu0 %v249
    %275 = vmatpush.msra.mxu0 %v248
    %276 = vmatpush.msra.mxu0 %v247
    %277 = vmatpush.msra.mxu0 %v246
    %278 = vmatpush.msra.mxu0 %v245
    %279 = vmatpush.msra.mxu0 %v244
    %280 = vmatmul.f32.gmra.mxu0 %v243
    %v281 = vpop.f32.mrf.mxu0
    %v282 = vadd.f32 %v262, %v281
    %283 = vdwg.mxu0
    %v284 = vmax.f32 %v282, 0.0
    %v285 = vrot.slane %v284, 4
    %v286 = vadd.f32 %v284, %v285
    %v287 = vrot.slane %v286, 2
    %v288 = vadd.f32 %v286, %v287
    %v289 = vrot.slane %v288, 1
    %v290 = vadd.f32 %v288, %v289
    %v291 = vmul.f32 %v290, %v132
    %v292 = vsub.f32 %v284, %v291
    %v293 = vmul.f32 %v292, %v292
    %v294 = vrot.slane %v293, 4
    %v295 = vadd.f32 %v293, %v294
    %v296 = vrot.slane %v295, 2
    %v297 = vadd.f32 %v295, %v296
    %v298 = vrot.slane %v297, 1
    %v299 = vadd.f32 %v297, %v298
    %v300 = vmul.f32 %v299, %v132
    %v301 = vld [vmem:[%s9] sm:$0x1]
    %v302 = vadd.f32 %v300, 1e-05
    %v303 = vrsqrt.pop %v302
    %v304 = vmul.f32 %v303, %v302
    %v305 = vmul.f32 %v304, %v303
    %v306 = vmul.f32 0.5, %v305
    %v307 = vsub.f32 1.5, %v306
    %v308 = vmul.f32 %v303, %v307
    %vm309 = vweird.f32 %v302
    %vm310 = vweird.f32 %v303
    %vm311 = vmor %vm309, %vm310
    %v312 = vsel %vm311, %v303, %v308
    %v313 = vmul.f32 %v301, %v312
    %v315 = vperm.slane %v313, 0
    %v317 = vmul.f32 %v292, %v315
    %v318 = vld [vmem:[%s10] sm:$0x1]
    %v320 = vperm.slane %v318, 0
    %v322 = vadd.f32 %v317, %v320
    %v323 = vld [vmem:[#allocation10] sm:$0xff]
    %v324 = vld [vmem:[#allocation10 + $0x8] sm:$0xff]
    %v325 = vld [vmem:[#allocation10 + $0x10] sm:$0xff]
    %v326 = vld [vmem:[#allocation10 + $0x18] sm:$0xff]
    %v327 = vld [vmem:[#allocation10 + $0x20] sm:$0xff]
    %v328 = vld [vmem:[#allocation10 + $0x28] sm:$0xff]
    %v329 = vld [vmem:[#allocation10 + $0x30] sm:$0xff]
    %v330 = vld [vmem:[#allocation10 + $0x38] sm:$0xff]
    %v331 = vld [vmem:[#allocation10 + $0x40] sm:$0xff]
    %v332 = vld [vmem:[#allocation10 + $0x48] sm:$0xff]
    %v333 = vld [vmem:[#allocation10 + $0x50] sm:$0xff]
    %v334 = vld [vmem:[#allocation10 + $0x58] sm:$0xff]
    %v335 = vld [vmem:[#allocation10 + $0x60] sm:$0xff]
    %v336 = vld [vmem:[#allocation10 + $0x68] sm:$0xff]
    %v337 = vld [vmem:[#allocation10 + $0x70] sm:$0xff]
    %v338 = vld [vmem:[#allocation10 + $0x78] sm:$0xff]
    %v339 = vld [vmem:[%s12] sm:$0x1]
    %v341 = vperm.slane %v339, 0
    %343 = vmatpush.msra.mxu0 %v338
    %344 = vmatpush.msra.mxu0 %v337
    %345 = vmatpush.msra.mxu0 %v336
    %346 = vmatpush.msra.mxu0 %v335
    %347 = vmatpush.msra.mxu0 %v334
    %348 = vmatpush.msra.mxu0 %v333
    %349 = vmatpush.msra.mxu0 %v332
    %350 = vmatpush.msra.mxu0 %v331
    %351 = vmatpush.msra.mxu0 %v330
    %352 = vmatpush.msra.mxu0 %v329
    %353 = vmatpush.msra.mxu0 %v328
    %354 = vmatpush.msra.mxu0 %v327
    %355 = vmatpush.msra.mxu0 %v326
    %356 = vmatpush.msra.mxu0 %v325
    %357 = vmatpush.msra.mxu0 %v324
    %358 = vmatpush.msra.mxu0 %v323
    %359 = vmatmul.f32.gmra.mxu0 %v322
    %v360 = vpop.f32.mrf.mxu0
    %v361 = vadd.f32 %v341, %v360
    %362 = vdwg.mxu0
    %v363 = vlaneseq
    %v364 = vand.u32 %v363, 127
    %vm365 = vcmp.lt.s32.totalorder %v364, 3
    %v366 = vsel %vm365, %v361, -1e+30
    %367 = vmax.xlane.f32.xlu0 %v366
    %v368 = vpop.xlane.xlu0 %367
    %v369 = vsub.f32 %v366, %v368
    %v370 = vmul.f32 %v369, 1.442695
    %v371 = vpow.pop %v370
    %372 = vadd.xlane.f32.xlu0 %v371
    %v373 = vpop.xlane.xlu0 %372
    %v374 = vrcp.pop %v373
    %v375 = vmul.f32 %v371, %v374
    %376 = vst [vmem:[#allocation11] sm:$0xff] %v375
    // Predicated region
    $region74: #{tpu_custom_call.1} parent=1 // pred_check
      _
    $region75: #{tpu_custom_call.1} parent=1 // pred_check_branch
      %378 = sbr.rel (0) target = $region77
    $region76: #{tpu_custom_call.1} parent=1 // pred_region
      %380 = vsyncadd [#allocation4], 0
      %s382 = sshll.u32 [#allocation11], 4
      %s383 = int_to_ptr.vmem [resolvable:$true] %s382
      %s384 = sshll.u32 %s13, 4
      %s385 = int_to_ptr.hbm [resolvable:$true] %s384
      %387 = dma.vmem_to_hbm [thread:$0]  %s383, 128, %s385, [#allocation4]
    $region77: #{tpu_custom_call.1} parent=1 // pred_fallthru
      _
    // Predicated region
    $region78: #{tpu_custom_call.1} parent=1 // pred_check
      _
    $region79: #{tpu_custom_call.1} parent=1 // pred_check_branch
      %389 = sbr.rel (0) target = $region81
    $region80: #{tpu_custom_call.1} parent=1 // pred_region
      %391 = dma.done [#allocation4], 128
    $region81: #{tpu_custom_call.1} parent=1 // pred_fallthru
      _
    %392 = vsyncpa [#allocation3], 1
    %393 = vsyncpa [#allocation6], 1
    %394 = vsyncpa [#allocation9], 1
    %395 = vsyncpa [#allocation4], 1

</llo_original>
